<compile_context>
chip_gen: v7x
topology: tpu7x:2x2x1
jax: 0.10.0
libtpu: 0.0.40
codegen_flags: <defaults>
</compile_context>

<pallas_src>
import numpy as np
import jax
import jax.numpy as jnp
from jax.experimental import pallas as pl
from jax.experimental.pallas import tpu as pltpu


# --------------------------------------------------------------------------
# Pallas kernel: dice-cost + min / first-argmin over targets, batched
# --------------------------------------------------------------------------
def _dice_assign_kernel(outT_ref, tgt_ref, minval_ref, minidx_ref):
    # outT_ref: (B, P, Q)   predicted mask logits at P sampled points (bf16),
    #                       pre-transposed so the contraction dim P sits on
    #                       the sublane axis of the RHS (no in-kernel vxpose).
    # tgt_ref:  (B, T+1, P) target masks at points (bf16); last row is ones.
    # Single-EUP-push sigmoid: sigmoid(x) = 0.5 * (1 + tanh(0.5 * x)).
    # Elementwise math in f32 (safe on v5e which has no bf16 VPU/EUP), result
    # cast back to bf16 so the MXU sees the native bf16 path.
    x = outT_ref[...].astype(jnp.float32)                         # (B, P, Q)
    inp = (0.5 * (1.0 + jnp.tanh(0.5 * x))).astype(jnp.bfloat16)  # (B, P, Q)
    tgt_ext = tgt_ref[...]                                        # (B, T+1, P) bf16
    T = tgt_ext.shape[1] - 1

    # Single MXU pass per batch: rows 0..T-1 give <tgt, sigmoid(out)>,
    # row T (the appended ones row) gives sum_p sigmoid(out)[p, q].
    dots = jnp.einsum("btp,bpq->btq", tgt_ext, inp,
                      preferred_element_type=jnp.float32)         # (B, T+1, Q)
    numer = 2.0 * dots[:, :T, :]                                  # (B, T, Q)
    inp_sum = dots[:, T:, :]                                      # (B, 1, Q)

    # Target row-sums on the XLU (cross-lane reduce); f32 accumulation.
    tgt_sum = jnp.sum(tgt_ext[:, :T, :].astype(jnp.float32),
                      axis=2, keepdims=True)                      # (B, T, 1)

    denom = inp_sum + tgt_sum                                     # (B, T, Q)
    # approx reciprocal: shares the (single) EUP slot with the sigmoid; the
    # ~1e-3 relative error is far below the 0.4 decision threshold.
    cost = 1.0 - (numer + 1.0) * pl.reciprocal(denom + 1.0, approx=True)

    # min / first-argmin over targets; results land lane-dense as (B, 1, Q).
    # TODO(synk): if bpb*T*Q grows enough to spill vregs, restructure this as
    # a fori_loop over T chunks carrying running (min_val, min_idx).
    min_val = jnp.min(cost, axis=1, keepdims=True)                # (B, 1, Q)
    iota_t = jax.lax.broadcasted_iota(jnp.int32, cost.shape, 1)
    min_idx = jnp.min(jnp.where(cost <= min_val, iota_t, T),
                      axis=1, keepdims=True).astype(jnp.int32)    # (B, 1, Q)

    minval_ref[...] = min_val
    minidx_ref[...] = min_idx


def _vmem_capacity_bytes():
    try:
        info = pltpu.get_tpu_info()
        return int(getattr(info, "vmem_capacity_bytes", 64 << 20))
    except Exception:
        return 64 << 20


def _pick_batches_per_block(bs, per_batch_bytes, budget_bytes):
    """Largest divisor of bs (capped at bs//2 so the grid has >=2 steps for
    v7x's two TensorCores) whose working set fits the per-block budget."""
    cap = max(1, bs // 2) if bs > 1 else 1
    bpb = int(max(1, min(cap, budget_bytes // max(per_batch_bytes, 1))))
    while bs % bpb:
        bpb -= 1
    return bpb


def dice_assign(out_pts, tgt_pts, *, in_dtype=jnp.bfloat16):
    """out_pts: (bs, Q, P) mask logits at points; tgt_pts: (bs, T, P).

    Returns min_val (bs, Q) f32 and min_idx (bs, Q) i32 (min / first-argmin
    of the dice cost over targets).
    """
    bs, Q, P = out_pts.shape
    T = tgt_pts.shape[1]

    # Lane-dense padding.  Point pad: logits -> -1e9 (sigmoid -> 0), targets
    # -> 0, so the dice cost is unchanged.  Query pad: -1e9 logits; padded
    # queries are sliced off before returning.
    P_pad = max(128, pl.cdiv(P, 128) * 128)
    Q_pad = max(128, pl.cdiv(Q, 128) * 128)
    out_pts = jnp.pad(out_pts, ((0, 0), (0, Q_pad - Q), (0, P_pad - P)),
                      constant_values=-1e9)
    tgt_pts = jnp.pad(tgt_pts, ((0, 0), (0, 0), (0, P_pad - P)),
                      constant_values=0.0)

    # bf16 DMA (halves HBM->VMEM traffic).  Pre-transpose the prediction
    # block to (bs, P, Q) in XLA (layout plumbing) so the in-kernel matmul
    # is a straight (T+1,P) x (P,Q) with no XLU relayout.
    outT = jnp.transpose(out_pts, (0, 2, 1)).astype(in_dtype)     # (bs, P, Q)
    tgt_ext = jnp.concatenate(
        [tgt_pts, jnp.ones((bs, 1, P_pad), dtype=tgt_pts.dtype)],
        axis=1).astype(in_dtype)                                  # (bs, T+1, P)

    # ---- VMEM budgeting (generation-aware, intermediate-aware) ----
    itemsize = jnp.dtype(in_dtype).itemsize
    dma_per_batch = (Q_pad + T + 1) * P_pad * itemsize + Q_pad * 8
    # f32 temp for the tanh chain + bf16 sigmoid result + small f32 (T+1,Q)
    # dots/cost/argmin temps.
    work_per_batch = (Q_pad * P_pad * (4 + itemsize)
                      + (T + 1) * Q_pad * 4 * 3)
    per_batch_total = dma_per_batch + work_per_batch

    vmem_cap = _vmem_capacity_bytes()
    if vmem_cap >= (96 << 20):          # 128 MiB parts (v5e / v6e)
        budget, limit_ceiling = 20 << 20, 96 << 20
    else:                               # 64 MiB parts (v7x)
        budget, limit_ceiling = 8 << 20, 44 << 20

    bpb = _pick_batches_per_block(bs, per_batch_total, budget)
    vmem_limit = int(min(limit_ceiling,
                         max(32 << 20,
                             2 * bpb * dma_per_batch
                             + bpb * work_per_batch + (2 << 20))))

    grid = (bs // bpb,)

    min_val, min_idx = pl.pallas_call(
        _dice_assign_kernel,
        out_shape=(jax.ShapeDtypeStruct((bs, 1, Q_pad), jnp.float32),
                   jax.ShapeDtypeStruct((bs, 1, Q_pad), jnp.int32)),
        grid_spec=pltpu.PrefetchScalarGridSpec(
            num_scalar_prefetch=0,
            grid=grid,
            in_specs=[pl.BlockSpec((bpb, P_pad, Q_pad), lambda i: (i, 0, 0)),
                      pl.BlockSpec((bpb, T + 1, P_pad), lambda i: (i, 0, 0))],
            out_specs=[pl.BlockSpec((bpb, 1, Q_pad), lambda i: (i, 0, 0)),
                       pl.BlockSpec((bpb, 1, Q_pad), lambda i: (i, 0, 0))]),
        compiler_params=pltpu.CompilerParams(
            # each grid step writes a disjoint batch block -> legal parallel
            # axis; with >=2 steps v7x shards it across both TensorCores.
            dimension_semantics=("parallel",),
            vmem_limit_bytes=vmem_limit),
    )(outT, tgt_ext)
    return min_val[:, 0, :Q], min_idx[:, 0, :Q]


# --------------------------------------------------------------------------
# Glue: point_sample == F.grid_sample(x[:, None], 2*coords - 1,
#                                     mode='bilinear', padding_mode='zeros',
#                                     align_corners=False).flatten(1)
# --------------------------------------------------------------------------
def point_sample(masks, coords):
    """masks: (N, H, W) float, coords: (P, 2) in [0, 1), (x, y) order.

    Returns (N, P) bilinear samples, matching torch grid_sample with
    align_corners=False and zero padding.
    """
    N, H, W = masks.shape
    x = coords[:, 0] * W - 0.5
    y = coords[:, 1] * H - 0.5
    x0 = jnp.floor(x)
    y0 = jnp.floor(y)
    x1 = x0 + 1.0
    y1 = y0 + 1.0
    wx1 = x - x0
    wx0 = 1.0 - wx1
    wy1 = y - y0
    wy0 = 1.0 - wy1

    def gather(xi, yi):
        xi_i = xi.astype(jnp.int32)
        yi_i = yi.astype(jnp.int32)
        in_bounds = ((xi_i >= 0) & (xi_i < W) & (yi_i >= 0) & (yi_i < H))
        xi_c = jnp.clip(xi_i, 0, W - 1)
        yi_c = jnp.clip(yi_i, 0, H - 1)
        vals = masks[:, yi_c, xi_c]                       # (N, P)
        return vals * in_bounds.astype(masks.dtype)[None, :]

    return (gather(x0, y0) * (wx0 * wy0)[None, :]
            + gather(x1, y0) * (wx1 * wy0)[None, :]
            + gather(x0, y1) * (wx0 * wy1)[None, :]
            + gather(x1, y1) * (wx1 * wy1)[None, :])


@jax.jit
def _sample_and_assign(pred_masks, tgt_masks, coords):
    """Batched point sampling (vmapped gathers) fused with the Pallas kernel
    under a single jit, replacing the per-batch Python loop of untraced ops."""
    out_pts = jax.vmap(point_sample)(pred_masks, coords)  # (bs, Q, P)
    tgt_pts = jax.vmap(point_sample)(tgt_masks, coords)   # (bs, T, P)
    return dice_assign(out_pts, tgt_pts)


# --------------------------------------------------------------------------
# LabelAssigner wrapper (forward semantics of the PyTorch module)
# --------------------------------------------------------------------------
class LabelAssigner:
    def __init__(self, cost_class=1.0, cost_mask=1.0, cost_dice=1.0,
                 num_points=32):
        assert cost_dice != 0, "all costs cant be 0"
        self.cost_class = cost_class
        self.cost_mask = cost_mask
        self.cost_dice = cost_dice
        self.num_points = num_points

    def forward(self, outputs, targets, key):
        pred_masks = outputs["pred_masks"]                # (bs, Q, H, W)
        bs, num_queries = outputs["pred_logits"].shape[:2]

        # TODO(synk): all batches are assumed to share the same target count
        # so they can be stacked; ragged per-batch T would need padding.
        tgt_masks = jnp.stack(
            [t["masks"].astype(pred_masks.dtype) for t in targets], axis=0)

        if tgt_masks.shape[1] == 0:
            empty = np.array([], dtype=np.int64)
            return [(empty, empty) for _ in range(bs)]

        # torch.rand(1, num_points, 2) per batch -> same points for all
        # masks of a batch, different points across batches.
        keys = jax.random.split(key, bs)
        coords = jax.vmap(
            lambda k: jax.random.uniform(k, (self.num_points, 2),
                                         dtype=jnp.float32))(keys)

        min_val, min_idx = _sample_and_assign(pred_masks, tgt_masks, coords)
        min_val = np.asarray(jax.block_until_ready(min_val))
        min_idx = np.asarray(jax.block_until_ready(min_idx))

        # Ragged boolean compression stays on the host (no Pallas equivalent).
        indices = []
        for b in range(bs):
            valid = min_val[b] < 0.4
            indices.append((
                np.arange(num_queries, dtype=np.int64)[valid],
                min_idx[b][valid].astype(np.int64),
            ))
        return indices


# --------------------------------------------------------------------------
# Reference (pure jnp) for sanity checking the kernel
# --------------------------------------------------------------------------
def _dice_cost_ref(out_pts, tgt_pts):
    """Full (bs, Q, T) dice cost, mirroring the kernel's bf16 quantization of
    the matmul operands (f32 accumulation, exact divide)."""
    inp = jax.nn.sigmoid(out_pts.astype(jnp.bfloat16).astype(jnp.float32))
    inp = inp.astype(jnp.bfloat16).astype(jnp.float32)
    tgt = tgt_pts.astype(jnp.bfloat16).astype(jnp.float32)
    numer = 2.0 * jnp.einsum("bqp,btp->bqt", inp, tgt)
    denom = inp.sum(-1)[:, :, None] + tgt.sum(-1)[:, None, :]
    return 1.0 - (numer + 1.0) / (denom + 1.0)


if __name__ == "__main__":
    bs, num_queries, num_targets = 2, 16, 4
    H = W = 16
    num_points = 32
    num_classes = 8

    key = jax.random.PRNGKey(0)
    k1, k2, k3, k4 = jax.random.split(key, 4)

    outputs = {
        "pred_logits": jax.random.normal(k1, (bs, num_queries, num_classes),
                                         dtype=jnp.float32),
        "pred_masks": jax.random.normal(k2, (bs, num_queries, H, W),
                                        dtype=jnp.float32) * 4.0,
    }
    targets = [
        {"masks": (jax.random.uniform(k3, (num_targets, H, W)) > 0.5
                   ).astype(jnp.float32)},
        {"masks": (jax.random.uniform(k4, (num_targets, H, W)) > 0.5
                   ).astype(jnp.float32)},
    ]

    assigner = LabelAssigner(num_points=num_points)
    indices = assigner.forward(outputs, targets, jax.random.PRNGKey(0))

    # sanity-check the Pallas kernel against a pure-JAX reference
    pts_keys = jax.random.split(jax.random.PRNGKey(0), bs)
    coords = jax.vmap(lambda k: jax.random.uniform(k, (num_points, 2),
                                                   dtype=jnp.float32))(pts_keys)
    out_pts = jax.vmap(point_sample)(outputs["pred_masks"], coords)
    tgt_masks = jnp.stack([t["masks"] for t in targets], axis=0)
    tgt_pts = jax.vmap(point_sample)(tgt_masks, coords)

    mv_k, mi_k = dice_assign(out_pts, tgt_pts)
    jax.block_until_ready(mv_k)

    cost_ref = np.asarray(_dice_cost_ref(out_pts, tgt_pts))   # (bs, Q, T)
    mv_r = cost_ref.min(axis=2)

    mv_k = np.asarray(mv_k)
    mi_k = np.asarray(mi_k)

    # min values match the reference (tolerance covers the tanh-form sigmoid
    # and the approx-EUP reciprocal, both << the 0.4 decision threshold)
    np.testing.assert_allclose(mv_k, mv_r, rtol=1e-2, atol=1e-2)
    # chosen indices are in range and achieve (approximately) the ref minimum
    assert np.all((mi_k >= 0) & (mi_k < num_targets))
    picked = np.take_along_axis(cost_ref, mi_k[:, :, None], axis=2)[:, :, 0]
    np.testing.assert_allclose(picked, mv_r, atol=2e-2)

    for b, (q_idx, t_idx) in enumerate(indices):
        assert q_idx.dtype == np.int64 and t_idx.dtype == np.int64
        assert q_idx.shape == t_idx.shape

    print("KERNEL_OK")
</pallas_src>

<mosaic_0001>
module attributes {stable_mosaic.version = 11 : i64} {
  func.func @_dice_assign_kernel(%arg0: i32, %arg1: memref<1x128x128xbf16, #tpu.memory_space<vmem>>, %arg2: memref<1x5x128xbf16, #tpu.memory_space<vmem>>, %arg3: memref<1x1x128xf32, #tpu.memory_space<vmem>>, %arg4: memref<1x1x128xi32, #tpu.memory_space<vmem>>) attributes {dimension_semantics = [#tpu.dimension_semantics<parallel>], iteration_bounds = array<i64: 2>, scalar_prefetch = 0 : i64, scratch_operands = 0 : i64, tpu.core_type = #tpu.core_type<tc>, window_params = [{transform_indices = @transform_0, window_bounds = array<i64: 1, 128, 128>}, {transform_indices = @transform_1, window_bounds = array<i64: 1, 5, 128>}, {transform_indices = @transform_2, window_bounds = array<i64: 1, 1, 128>}, {transform_indices = @transform_3, window_bounds = array<i64: 1, 1, 128>}]} {
    %c0 = arith.constant 0 : index
    %c0_0 = arith.constant 0 : index
    %c0_1 = arith.constant 0 : index
    %0 = vector.load %arg1[%c0, %c0_0, %c0_1] : memref<1x128x128xbf16, #tpu.memory_space<vmem>>, vector<1x128x128xbf16>
    %1 = arith.extf %0 : vector<1x128x128xbf16> to vector<1x128x128xf32>
    %cst = arith.constant 5.000000e-01 : f32
    %2 = vector.broadcast %cst : f32 to vector<1x128x128xf32>
    %3 = arith.mulf %2, %1 : vector<1x128x128xf32>
    %4 = math.tanh %3 : vector<1x128x128xf32>
    %cst_2 = arith.constant 1.000000e+00 : f32
    %5 = vector.broadcast %cst_2 : f32 to vector<1x128x128xf32>
    %6 = arith.addf %5, %4 : vector<1x128x128xf32>
    %cst_3 = arith.constant 5.000000e-01 : f32
    %7 = vector.broadcast %cst_3 : f32 to vector<1x128x128xf32>
    %8 = arith.mulf %7, %6 : vector<1x128x128xf32>
    %9 = arith.truncf %8 : vector<1x128x128xf32> to vector<1x128x128xbf16>
    %c0_4 = arith.constant 0 : index
    %c0_5 = arith.constant 0 : index
    %c0_6 = arith.constant 0 : index
    %10 = vector.load %arg2[%c0_4, %c0_5, %c0_6] : memref<1x5x128xbf16, #tpu.memory_space<vmem>>, vector<1x5x128xbf16>
    "tpu.trace_start"() <{level = 10 : i32, message = "btp,bpq->btq"}> : () -> ()
    %cst_7 = arith.constant dense<0.000000e+00> : vector<1x5x128xf32>
    %11 = tpu.matmul %10, %9, %cst_7 {dimension_numbers = #tpu.dot_dimension_numbers<[2], [1], [1], [2], [0, 0, 0, 1, 1, 2], [0], [0]>} : vector<1x5x128xbf16>, vector<1x128x128xbf16>, vector<1x5x128xf32> -> vector<1x5x128xf32>
    "tpu.trace_stop"() : () -> ()
    %12 = vector.extract_strided_slice %11 {offsets = [0, 0, 0], sizes = [1, 4, 128], strides = [1, 1, 1]} : vector<1x5x128xf32> to vector<1x4x128xf32>
    %cst_8 = arith.constant 2.000000e+00 : f32
    %13 = vector.broadcast %cst_8 : f32 to vector<1x4x128xf32>
    %14 = arith.mulf %13, %12 : vector<1x4x128xf32>
    %15 = vector.extract_strided_slice %11 {offsets = [0, 4, 0], sizes = [1, 1, 128], strides = [1, 1, 1]} : vector<1x5x128xf32> to vector<1x1x128xf32>
    %16 = vector.extract_strided_slice %10 {offsets = [0, 0, 0], sizes = [1, 4, 128], strides = [1, 1, 1]} : vector<1x5x128xbf16> to vector<1x4x128xbf16>
    %17 = arith.extf %16 : vector<1x4x128xbf16> to vector<1x4x128xf32>
    %cst_9 = arith.constant dense<0.000000e+00> : vector<1x4xf32>
    %18 = vector.multi_reduction <add>, %17, %cst_9 [2] : vector<1x4x128xf32> to vector<1x4xf32>
    %19 = vector.shape_cast %18 : vector<1x4xf32> to vector<1x4x1xf32>
    %20 = vector.broadcast %15 : vector<1x1x128xf32> to vector<1x4x128xf32>
    %21 = vector.broadcast %19 : vector<1x4x1xf32> to vector<1x4x128xf32>
    %22 = arith.addf %20, %21 : vector<1x4x128xf32>
    %cst_10 = arith.constant 1.000000e+00 : f32
    %23 = vector.broadcast %cst_10 : f32 to vector<1x4x128xf32>
    %24 = arith.addf %14, %23 : vector<1x4x128xf32>
    %cst_11 = arith.constant 1.000000e+00 : f32
    %25 = vector.broadcast %cst_11 : f32 to vector<1x4x128xf32>
    %26 = arith.addf %22, %25 : vector<1x4x128xf32>
    %27 = tpu.reciprocal %26 {approx = true} : vector<1x4x128xf32> -> vector<1x4x128xf32>
    %28 = arith.mulf %24, %27 : vector<1x4x128xf32>
    %cst_12 = arith.constant 1.000000e+00 : f32
    %29 = vector.broadcast %cst_12 : f32 to vector<1x4x128xf32>
    %30 = arith.subf %29, %28 : vector<1x4x128xf32>
    %cst_13 = arith.constant dense<0x7F800000> : vector<1x128xf32>
    %31 = vector.multi_reduction <minimumf>, %30, %cst_13 [1] : vector<1x4x128xf32> to vector<1x128xf32>
    %32 = vector.shape_cast %31 : vector<1x128xf32> to vector<1x1x128xf32>
    %33 = tpu.iota {dimensions = array<i32: 1>} : vector<1x4x128xi32>
    %34 = vector.broadcast %32 : vector<1x1x128xf32> to vector<1x4x128xf32>
    %35 = arith.cmpf ole, %30, %34 : vector<1x4x128xf32>
    %c4_i32 = arith.constant 4 : i32
    %36 = vector.broadcast %c4_i32 : i32 to vector<1x4x128xi32>
    %37 = arith.select %35, %33, %36 : vector<1x4x128xi1>, vector<1x4x128xi32>
    %cst_14 = arith.constant dense<2147483647> : vector<1x128xi32>
    %38 = vector.multi_reduction <minsi>, %37, %cst_14 [1] : vector<1x4x128xi32> to vector<1x128xi32>
    %39 = vector.shape_cast %38 : vector<1x128xi32> to vector<1x1x128xi32>
    %c0_15 = arith.constant 0 : index
    %c0_16 = arith.constant 0 : index
    %c0_17 = arith.constant 0 : index
    %40 = vector.load %arg3[%c0_15, %c0_16, %c0_17] : memref<1x1x128xf32, #tpu.memory_space<vmem>>, vector<1x1x128xf32>
    tpu.vector_store %arg3[%c0_15, %c0_16, %c0_17], %32 {strides = array<i32>} : memref<1x1x128xf32, #tpu.memory_space<vmem>>, vector<1x1x128xf32>,
    %c0_18 = arith.constant 0 : index
    %c0_19 = arith.constant 0 : index
    %c0_20 = arith.constant 0 : index
    %41 = vector.load %arg4[%c0_18, %c0_19, %c0_20] : memref<1x1x128xi32, #tpu.memory_space<vmem>>, vector<1x1x128xi32>
    tpu.vector_store %arg4[%c0_18, %c0_19, %c0_20], %39 {strides = array<i32>} : memref<1x1x128xi32, #tpu.memory_space<vmem>>, vector<1x1x128xi32>,
    return
  }
  func.func @transform_0(%arg0: i32) -> (i32, i32, i32) {
    %c0_i32 = arith.constant 0 : i32
    %c0_i32_0 = arith.constant 0 : i32
    %c0_i32_1 = arith.constant 0 : i32
    return %arg0, %c0_i32, %c0_i32_0 : i32, i32, i32
  }
  func.func @transform_1(%arg0: i32) -> (i32, i32, i32) {
    %c0_i32 = arith.constant 0 : i32
    %c0_i32_0 = arith.constant 0 : i32
    %c0_i32_1 = arith.constant 0 : i32
    return %arg0, %c0_i32, %c0_i32_0 : i32, i32, i32
  }
  func.func @transform_2(%arg0: i32) -> (i32, i32, i32) {
    %c0_i32 = arith.constant 0 : i32
    %c0_i32_0 = arith.constant 0 : i32
    %c0_i32_1 = arith.constant 0 : i32
    return %arg0, %c0_i32, %c0_i32_0 : i32, i32, i32
  }
  func.func @transform_3(%arg0: i32) -> (i32, i32, i32) {
    %c0_i32 = arith.constant 0 : i32
    %c0_i32_0 = arith.constant 0 : i32
    %c0_i32_1 = arith.constant 0 : i32
    return %arg0, %c0_i32, %c0_i32_0 : i32, i32, i32
  }
}

</mosaic_0001>

<llo_original>
// kernel: _sample_and_assign.1
$region0: #{_sample_and_assign.1}
  #allocation0 [shape = 'u32[]', space=smem, size = 0x4, offset = 0x4, fixed_abs, tag = 'smem constant byte address 0x4 - core index']
  #allocation1 [shape = 'u32[144,128]{1,0:T(1,128)}', space=vmem, size = 0x12000, scoped, tag = 'internal scratch']
  %s0 = inlined_call_operand.vmem [shape: bf16[2,128,128], index: 0, kind: input, shape index: {}]
  %s1 = inlined_call_operand.vmem [shape: bf16[2,5,128], index: 1, kind: input, shape index: {}]
  %s2 = inlined_call_operand.hbm [shape: f32[2,1,128], index: 2, kind: output, shape index: {0}]
  %s3 = inlined_call_operand.hbm [shape: s32[2,1,128], index: 3, kind: output, shape index: {1}]
  %4 = xla_tuple %s2, %s3
  %s5 = sld [smem:[#allocation0]]
  $region49: #{_sample_and_assign.1} parent=0
    _
  %s7 = ssub.s32 1, %s5
  %s8 = scalar_select 0, %s7, %s5
  $region1: #{_sample_and_assign.1} parent=0
    #allocation2 [shape = 'u8[1024]{0}', space=vmem, size = 0x400, scoped, tag = 'output window, operand 0']
    #allocation3 [shape = 's32[2]{0}', space=sflag, size = 0x8, scoped, tag = 'scoped memory for _sample_and_assign.1']
    #allocation4 [shape = 'u8[1024]{0}', space=vmem, size = 0x400, scoped, tag = 'output window, operand 1']
    #allocation5 [shape = 's32[2]{0}', space=sflag, size = 0x8, scoped, tag = 'scoped memory for _sample_and_assign.1']
    %9 = vsyncpa [#allocation3], 0
    %s10 = scalar_lea.sflag [#allocation3], 1
    %11 = vsyncpa %s10, 0
    %12 = vsyncpa [#allocation5], 0
    %s13 = scalar_lea.sflag [#allocation5], 1
    %14 = vsyncpa %s13, 0
    loop: start=0, step=1, limit=4
    $region2: #{_sample_and_assign.1} parent=1 // loop_pre_header
      _
    $region3: #{_sample_and_assign.1} parent=1 // loop_header
      %s16 = sphi 0, %s20
      %p17 = scmp.ge.s32.totalorder %s16, 4
      %s26 = sphi 0, %s28
      %s29 = sphi 0, %s26
      %s30 = sphi 0, %s29
      %s46 = sphi 0, %s30
      %s52 = sphi 0, %s54
      %s55 = sphi 0, %s52
      %s56 = sphi 0, %s55
      %s72 = sphi 0, %s56
      %s78 = sphi 0, %s80
      %s81 = sphi 0, %s78
      %s82 = sphi 0, %s81
      %s98 = sphi 0, %s82
      %s104 = sphi 0, %s106
      %s107 = sphi 0, %s104
      %s108 = sphi 0, %s107
      %s124 = sphi 0, %s108
    $region4: #{_sample_and_assign.1} parent=1 // loop_header_branch
      %19 = sbr.rel (%p17) target = $region8
    $region5: #{_sample_and_assign.1} parent=1 // loop_body
      %s21 = ssub.s32 %s16, 1
      %s22 = ssub.s32 %s16, 2
      %s23 = sadd.s32 %s16, 1
      %s24 = ssub.s32 %s16, %s23
      %p25 = scmp.eq.s32.totalorder %s24, 0
      %s27 = sadd.s32 %s26, 1
      %s28 = scalar_select %p25, %s26, %s27
      %p31 = pneg %p25
      %p32 = scmp.eq.s32.totalorder %s16, 1
      %p33 = por %p31, %p32
      %p34 = scmp.ne.s32.totalorder %s26, %s29
      %p35 = scmp.eq.s32.totalorder %s16, 0
      %p36 = por %p34, %p35
      %p37 = scmp.ne.s32.totalorder %s26, %s29
      %p38 = scmp.eq.s32.totalorder %s21, 1
      %p39 = por %p37, %p38
      %p40 = scmp.ne.s32.totalorder %s29, %s30
      %p41 = scmp.eq.s32.totalorder %s21, 0
      %p42 = por %p40, %p41
      %p43 = scmp.ne.s32.totalorder %s29, %s30
      %p44 = scmp.eq.s32.totalorder %s22, 1
      %p45 = por %p43, %p44
      %p47 = scmp.ne.s32.totalorder %s30, %s46
      %p48 = scmp.eq.s32.totalorder %s22, 0
      %p49 = por %p47, %p48
      %s50 = ssub.s32 %s16, %s23
      %p51 = scmp.eq.s32.totalorder %s50, 0
      %s53 = sadd.s32 %s52, 1
      %s54 = scalar_select %p51, %s52, %s53
      %p57 = pneg %p51
      %p58 = scmp.eq.s32.totalorder %s16, 1
      %p59 = por %p57, %p58
      %p60 = scmp.ne.s32.totalorder %s52, %s55
      %p61 = scmp.eq.s32.totalorder %s16, 0
      %p62 = por %p60, %p61
      %p63 = scmp.ne.s32.totalorder %s52, %s55
      %p64 = scmp.eq.s32.totalorder %s21, 1
      %p65 = por %p63, %p64
      %p66 = scmp.ne.s32.totalorder %s55, %s56
      %p67 = scmp.eq.s32.totalorder %s21, 0
      %p68 = por %p66, %p67
      %p69 = scmp.ne.s32.totalorder %s55, %s56
      %p70 = scmp.eq.s32.totalorder %s22, 1
      %p71 = por %p69, %p70
      %p73 = scmp.ne.s32.totalorder %s56, %s72
      %p74 = scmp.eq.s32.totalorder %s22, 0
      %p75 = por %p73, %p74
      %s76 = ssub.s32 %s16, %s23
      %p77 = scmp.eq.s32.totalorder %s76, 0
      %s79 = sadd.s32 %s78, 1
      %s80 = scalar_select %p77, %s78, %s79
      %p83 = pneg %p77
      %p84 = scmp.eq.s32.totalorder %s16, 1
      %p85 = por %p83, %p84
      %p86 = scmp.ne.s32.totalorder %s78, %s81
      %p87 = scmp.eq.s32.totalorder %s16, 0
      %p88 = por %p86, %p87
      %p89 = scmp.ne.s32.totalorder %s78, %s81
      %p90 = scmp.eq.s32.totalorder %s21, 1
      %p91 = por %p89, %p90
      %p92 = scmp.ne.s32.totalorder %s81, %s82
      %p93 = scmp.eq.s32.totalorder %s21, 0
      %p94 = por %p92, %p93
      %p95 = scmp.ne.s32.totalorder %s81, %s82
      %p96 = scmp.eq.s32.totalorder %s22, 1
      %p97 = por %p95, %p96
      %p99 = scmp.ne.s32.totalorder %s82, %s98
      %p100 = scmp.eq.s32.totalorder %s22, 0
      %p101 = por %p99, %p100
      %s102 = ssub.s32 %s16, %s23
      %p103 = scmp.eq.s32.totalorder %s102, 0
      %s105 = sadd.s32 %s104, 1
      %s106 = scalar_select %p103, %s104, %s105
      %p109 = pneg %p103
      %p110 = scmp.eq.s32.totalorder %s16, 1
      %p111 = por %p109, %p110
      %p112 = scmp.ne.s32.totalorder %s104, %s107
      %p113 = scmp.eq.s32.totalorder %s16, 0
      %p114 = por %p112, %p113
      %p115 = scmp.ne.s32.totalorder %s104, %s107
      %p116 = scmp.eq.s32.totalorder %s21, 1
      %p117 = por %p115, %p116
      %p118 = scmp.ne.s32.totalorder %s107, %s108
      %p119 = scmp.eq.s32.totalorder %s21, 0
      %p120 = por %p118, %p119
      %p121 = scmp.ne.s32.totalorder %s107, %s108
      %p122 = scmp.eq.s32.totalorder %s22, 1
      %p123 = por %p121, %p122
      %p125 = scmp.ne.s32.totalorder %s108, %s124
      %p126 = scmp.eq.s32.totalorder %s22, 0
      %p127 = por %p125, %p126
      %p128 = scmp.le.s32.totalorder 1, %s16
      %p129 = scmp.lt.s32.totalorder %s16, 3
      %p130 = pnand %p128, %p129
      %p131 = pneg %p130
      // Predicated region
      $region9: #{_sample_and_assign.1} parent=5 // pred_check
        _
      $region10: #{_sample_and_assign.1} parent=5 // pred_check_branch
        %133 = sbr.rel (%p130) target = $region12
      $region11: #{_sample_and_assign.1} parent=5 // pred_region
        %s134 = ssub.s32 %s16, 1
      $region12: #{_sample_and_assign.1} parent=5 // pred_fallthru
        _
      %p135 = scmp.lt.s32.totalorder %s16, 2
      // Predicated region
      $region13: #{_sample_and_assign.1} parent=5 // pred_check
        %p136 = pneg %p135
      $region14: #{_sample_and_assign.1} parent=5 // pred_check_branch
        %138 = sbr.rel (%p136) target = $region16
      $region15: #{_sample_and_assign.1} parent=5 // pred_region
        // Predicated region
        $region17: #{_sample_and_assign.1} parent=15 // pred_check
          %p139 = pneg %p36
        $region18: #{_sample_and_assign.1} parent=15 // pred_check_branch
          %141 = sbr.rel (%p139) target = $region20
        $region19: #{_sample_and_assign.1} parent=15 // pred_region
          %p142 = scmp.lt.s32.totalorder %s16, 1
          %s143 = scalar_select %p142, %s16, 1
          %s144 = smul.addr %s143, 16
          %s145 = smul.addr %s144, 4
          %s146 = scalar_lea.vmem %s0, %s145
        $region20: #{_sample_and_assign.1} parent=15 // pred_fallthru
          _
        // Predicated region
        $region21: #{_sample_and_assign.1} parent=15 // pred_check
          %p147 = pneg %p62
        $region22: #{_sample_and_assign.1} parent=15 // pred_check_branch
          %149 = sbr.rel (%p147) target = $region24
        $region23: #{_sample_and_assign.1} parent=15 // pred_region
          %p150 = scmp.lt.s32.totalorder %s16, 1
          %s151 = scalar_select %p150, %s16, 1
          %s152 = smul.addr %s151, 4
          %s153 = scalar_lea.vmem %s1, %s152
        $region24: #{_sample_and_assign.1} parent=15 // pred_fallthru
          _
      $region16: #{_sample_and_assign.1} parent=5 // pred_fallthru
        _
      %p154 = scmp.le.s32.totalorder 1, %s16
      %p155 = scmp.lt.s32.totalorder %s16, 3
      %p156 = pnand %p154, %p155
      %p157 = pneg %p156
      // Predicated region
      $region25: #{_sample_and_assign.1} parent=5 // pred_check
        _
      $region26: #{_sample_and_assign.1} parent=5 // pred_check_branch
        %159 = sbr.rel (%p156) target = $region28
      $region27: #{_sample_and_assign.1} parent=5 // pred_region
        %s160 = ssub.s32 %s16, 1
        %p161 = scmp.lt.s32.totalorder %s21, 1
        %s162 = scalar_select %p161, %s21, 1
        %s163 = smul.addr %s162, 16
        %s164 = smul.addr %s163, 4
        %s165 = scalar_lea.vmem %s0, %s164
        %p166 = pneg %p42
        %p167 = pneg %p39
        %p168 = scmp.lt.s32.totalorder %s21, 1
        %s169 = scalar_select %p168, %s21, 1
        %s170 = smul.addr %s169, 4
        %s171 = scalar_lea.vmem %s1, %s170
        %p172 = pneg %p68
        %p173 = pneg %p65
        %p174 = pneg %p94
        %p175 = pneg %p91
        %s176 = sand.u32 %s81, 1
        %s177 = scalar_lea.sflag [#allocation3], %s176
        %s178 = sand.u32 %s81, 1
        %s179 = scalar_lea.vmem [#allocation2], %s178
        %p180 = pneg %p120
        %p181 = pneg %p117
        %s182 = sand.u32 %s107, 1
        %s183 = scalar_lea.sflag [#allocation5], %s182
        %s184 = sand.u32 %s107, 1
        %s185 = scalar_lea.vmem [#allocation4], %s184
        %p186 = scmp.lt.s32.totalorder %s21, 1
        %s187 = scalar_select %p186, %s21, 1
        %s188 = smul.addr %s187, 16
        %s189 = smul.addr %s188, 4
        %s190 = scalar_lea.vmem %s0, %s189
        %p191 = scmp.lt.s32.totalorder %s21, 1
        %s192 = scalar_select %p191, %s21, 1
        %s193 = smul.addr %s192, 4
        %s194 = scalar_lea.vmem %s1, %s193
        %v196 = vld [vmem:[%s190] sm:$0xf]
        %v197 = vld [vmem:[%s190 + $0x4] sm:$0xf]
        %v198 = vld [vmem:[%s190 + $0x8] sm:$0xf]
        %v199 = vld [vmem:[%s190 + $0xc] sm:$0xf]
        %v200 = vld [vmem:[%s190 + $0x10] sm:$0xf]
        %v201 = vld [vmem:[%s190 + $0x14] sm:$0xf]
        %v202 = vld [vmem:[%s190 + $0x18] sm:$0xf]
        %v203 = vld [vmem:[%s190 + $0x1c] sm:$0xf]
        %v204 = vld [vmem:[%s190 + $0x20] sm:$0xf]
        %v205 = vld [vmem:[%s190 + $0x24] sm:$0xf]
        %v206 = vld [vmem:[%s190 + $0x28] sm:$0xf]
        %v207 = vld [vmem:[%s190 + $0x2c] sm:$0xf]
        %v208 = vld [vmem:[%s190 + $0x30] sm:$0xf]
        %v209 = vld [vmem:[%s190 + $0x34] sm:$0xf]
        %v210 = vld [vmem:[%s190 + $0x38] sm:$0xf]
        %v211 = vld [vmem:[%s190 + $0x3c] sm:$0xf]
        %v212 = vunpack.c.l.bf16 %v196
        %v213 = vunpack.c.l.bf16 %v197
        %v214 = vunpack.c.l.bf16 %v198
        %v215 = vunpack.c.l.bf16 %v199
        %v216 = vunpack.c.l.bf16 %v200
        %v217 = vunpack.c.l.bf16 %v201
        %v218 = vunpack.c.l.bf16 %v202
        %v219 = vunpack.c.l.bf16 %v203
        %v220 = vunpack.c.l.bf16 %v204
        %v221 = vunpack.c.l.bf16 %v205
        %v222 = vunpack.c.l.bf16 %v206
        %v223 = vunpack.c.l.bf16 %v207
        %v224 = vunpack.c.l.bf16 %v208
        %v225 = vunpack.c.l.bf16 %v209
        %v226 = vunpack.c.l.bf16 %v210
        %v227 = vunpack.c.l.bf16 %v211
        %v228 = vmul.f32 %v212, 0.5
        %v229 = vmul.f32 %v213, 0.5
        %v230 = vmul.f32 %v214, 0.5
        %v231 = vmul.f32 %v215, 0.5
        %v232 = vmul.f32 %v216, 0.5
        %v233 = vmul.f32 %v217, 0.5
        %v234 = vmul.f32 %v218, 0.5
        %v235 = vmul.f32 %v219, 0.5
        %v236 = vmul.f32 %v220, 0.5
        %v237 = vmul.f32 %v221, 0.5
        %v238 = vmul.f32 %v222, 0.5
        %v239 = vmul.f32 %v223, 0.5
        %v240 = vmul.f32 %v224, 0.5
        %v241 = vmul.f32 %v225, 0.5
        %v242 = vmul.f32 %v226, 0.5
        %v243 = vmul.f32 %v227, 0.5
        %v244 = vtanh.pop %v228
        %v245 = vtanh.pop %v229
        %v246 = vtanh.pop %v230
        %v247 = vtanh.pop %v231
        %v248 = vtanh.pop %v232
        %v249 = vtanh.pop %v233
        %v250 = vtanh.pop %v234
        %v251 = vtanh.pop %v235
        %v252 = vtanh.pop %v236
        %v253 = vtanh.pop %v237
        %v254 = vtanh.pop %v238
        %v255 = vtanh.pop %v239
        %v256 = vtanh.pop %v240
        %v257 = vtanh.pop %v241
        %v258 = vtanh.pop %v242
        %v259 = vtanh.pop %v243
        %v260 = vadd.f32 %v244, 1.0
        %v261 = vadd.f32 %v245, 1.0
        %v262 = vadd.f32 %v246, 1.0
        %v263 = vadd.f32 %v247, 1.0
        %v264 = vadd.f32 %v248, 1.0
        %v265 = vadd.f32 %v249, 1.0
        %v266 = vadd.f32 %v250, 1.0
        %v267 = vadd.f32 %v251, 1.0
        %v268 = vadd.f32 %v252, 1.0
        %v269 = vadd.f32 %v253, 1.0
        %v270 = vadd.f32 %v254, 1.0
        %v271 = vadd.f32 %v255, 1.0
        %v272 = vadd.f32 %v256, 1.0
        %v273 = vadd.f32 %v257, 1.0
        %v274 = vadd.f32 %v258, 1.0
        %v275 = vadd.f32 %v259, 1.0
        %v276 = vmul.f32 %v260, 0.5
        %v277 = vmul.f32 %v261, 0.5
        %v278 = vmul.f32 %v262, 0.5
        %v279 = vmul.f32 %v263, 0.5
        %v280 = vmul.f32 %v264, 0.5
        %v281 = vmul.f32 %v265, 0.5
        %v282 = vmul.f32 %v266, 0.5
        %v283 = vmul.f32 %v267, 0.5
        %v284 = vmul.f32 %v268, 0.5
        %v285 = vmul.f32 %v269, 0.5
        %v286 = vmul.f32 %v270, 0.5
        %v287 = vmul.f32 %v271, 0.5
        %v288 = vmul.f32 %v272, 0.5
        %v289 = vmul.f32 %v273, 0.5
        %v290 = vmul.f32 %v274, 0.5
        %v291 = vmul.f32 %v275, 0.5
        %v292 = vpack.c.bf16 %v277, %v276
        %v293 = vpack.c.bf16 %v279, %v278
        %v294 = vpack.c.bf16 %v281, %v280
        %v295 = vpack.c.bf16 %v283, %v282
        %v296 = vpack.c.bf16 %v285, %v284
        %v297 = vpack.c.bf16 %v287, %v286
        %v298 = vpack.c.bf16 %v289, %v288
        %v299 = vpack.c.bf16 %v291, %v290
        %v300 = vld [vmem:[%s194] sm:$0x7]
        %301 = vmatprep.subr.bf16.mxu0 0
        %302 = vmatpush1.bf16.msra.mxu0 %v292
        %303 = vmatprep.subr.bf16.mxu0 0
        %304 = vmatpush1.bf16.msra.mxu0 %v293
        %305 = vmatprep.subr.bf16.mxu0 0
        %306 = vmatpush1.bf16.msra.mxu0 %v294
        %307 = vmatprep.subr.bf16.mxu0 0
        %308 = vmatpush1.bf16.msra.mxu0 %v295
        %309 = vmatprep.subr.bf16.mxu0 0
        %310 = vmatpush1.bf16.msra.mxu0 %v296
        %311 = vmatprep.subr.bf16.mxu0 0
        %312 = vmatpush1.bf16.msra.mxu0 %v297
        %313 = vmatprep.subr.bf16.mxu0 0
        %314 = vmatpush1.bf16.msra.mxu0 %v298
        %315 = vmatprep.subr.bf16.mxu0 0
        %316 = vmatpush1.bf16.msra.mxu0 %v299
        %317 = vmatprep.subr.bf16.mxu0 0
        %318 = vmatpush1.bf16.msra.mxu0 0
        %319 = vmatprep.subr.bf16.mxu0 0
        %320 = vmatpush1.bf16.msra.mxu0 0
        %321 = vmatprep.subr.bf16.mxu0 0
        %322 = vmatpush1.bf16.msra.mxu0 0
        %323 = vmatprep.subr.bf16.mxu0 0
        %324 = vmatpush1.bf16.msra.mxu0 0
        %325 = vmatprep.subr.bf16.mxu0 0
        %326 = vmatpush1.bf16.msra.mxu0 0
        %327 = vmatprep.subr.bf16.mxu0 0
        %328 = vmatpush1.bf16.msra.mxu0 0
        %329 = vmatprep.subr.bf16.mxu0 0
        %330 = vmatpush1.bf16.msra.mxu0 0
        %331 = vmatprep.subr.bf16.mxu0 0
        %332 = vmatpush1.bf16.msra.mxu0 0
        %333 = vmatprep.mubr.bf16.mxu0 0
        %334 = vmatmul.mubr.bf16.gmra.mrb[0].mxu0 %v300
        %v335 = vpop.f32.mrb[0].mxu0
        %v336 = vadd.f32 0.0, %v335
        %v337 = vpop.f32.mrb[0].mxu0
        %v338 = vpop.f32.mrb[0].mxu0
        %v339 = vpop.f32.mrb[0].mxu0
        %340 = vdwg.mxu0
        %v341 = vmul.f32 %v336, 2.0
        %v342 = vunpack.c.l.bf16 %v300
        %vm343 = vcmask 1043456
        %v344 = vsel %vm343, %v342, 0.0
        %345 = vadd.xlane.f32.xlu0 %v344
        %v346 = vpop.xlane.xlu0 %345
        %v347 = vlaneseq
        %v348 = vshrl.u32 %v347, 7
        %v349 = vsub.s32 4, %v348
        %v350 = vrot.slane %v336, %v349
        %v351 = vadd.f32 %v350, %v346
        %v352 = vadd.f32 %v341, 1.0
        %v353 = vadd.f32 %v351, 1.0
        %v354 = vrcp.pop %v353
        %v355 = vmul.f32 %v352, %v354
        %v356 = vsub.f32 1.0, %v355
        %v357 = vsel %vm343, %v356, inf
        %v358 = vrot.slane %v357, 4
        %v359 = vmin.f32 %v357, %v358
        %v360 = vrot.slane %v359, 2
        %v361 = vmin.f32 %v359, %v360
        %v362 = vrot.slane %v361, 1
        %v363 = vmin.f32 %v361, %v362
        %v364 = vlaneseq
        %v365 = vshrl.u32 %v364, 7
        %vm366 = vcmp.le.f32.partialorder %v356, %v363
        %v367 = vsel %vm366, %v365, 4
        %v368 = vsel %vm343, %v367, 2147483647
        %v369 = vrot.slane %v368, 4
        %vm370 = vcmp.lt.s32.totalorder %v368, %v369
        %v371 = vsel %vm370, %v368, %v369
        %v372 = vrot.slane %v371, 2
        %vm373 = vcmp.lt.s32.totalorder %v371, %v372
        %v374 = vsel %vm373, %v371, %v372
        %v375 = vrot.slane %v374, 1
        %vm376 = vcmp.lt.s32.totalorder %v374, %v375
        %v377 = vsel %vm376, %v374, %v375
        %378 = vst [vmem:[%s179] sm:$0x1] %v363
        %379 = vst [vmem:[%s185] sm:$0x1] %v377
        %s380 = sand.u32 %s81, 1
        %s381 = scalar_lea.sflag [#allocation3], %s380
        %s382 = sand.u32 %s81, 1
        %s383 = scalar_lea.vmem [#allocation2], %s382
        %s384 = sand.u32 %s107, 1
        %s385 = scalar_lea.sflag [#allocation5], %s384
        %s386 = sand.u32 %s107, 1
        %s387 = scalar_lea.vmem [#allocation4], %s386
        // Predicated region
        $region29: #{_sample_and_assign.1} parent=27 // pred_check
          %p388 = pneg %p91
        $region30: #{_sample_and_assign.1} parent=27 // pred_check_branch
          %390 = sbr.rel (%p388) target = $region32
        $region31: #{_sample_and_assign.1} parent=27 // pred_region
          %s392 = ssub.s32 16, 16
          %393 = vsyncadd %s381, %s392
          %s394 = smul.addr %s21, 16
          %s395 = scalar_lea.hbm %s2, %s394
          %s397 = sshll.u32 %s383, 4
          %s398 = int_to_ptr.vmem [resolvable:$true] %s397
          %400 = dma.vmem_to_hbm [thread:$0]  %s398, 16, %s395, %s381
        $region32: #{_sample_and_assign.1} parent=27 // pred_fallthru
          _
        // Predicated region
        $region33: #{_sample_and_assign.1} parent=27 // pred_check
          %p401 = pneg %p117
        $region34: #{_sample_and_assign.1} parent=27 // pred_check_branch
          %403 = sbr.rel (%p401) target = $region36
        $region35: #{_sample_and_assign.1} parent=27 // pred_region
          %s405 = ssub.s32 16, 16
          %406 = vsyncadd %s385, %s405
          %s407 = smul.addr %s21, 16
          %s408 = scalar_lea.hbm %s3, %s407
          %s410 = sshll.u32 %s387, 4
          %s411 = int_to_ptr.vmem [resolvable:$true] %s410
          %413 = dma.vmem_to_hbm [thread:$0]  %s411, 16, %s408, %s385
        $region36: #{_sample_and_assign.1} parent=27 // pred_fallthru
          _
      $region28: #{_sample_and_assign.1} parent=5 // pred_fallthru
        _
      %p414 = scmp.le.s32.totalorder 2, %s16
      // Predicated region
      $region37: #{_sample_and_assign.1} parent=5 // pred_check
        %p415 = pneg %p414
      $region38: #{_sample_and_assign.1} parent=5 // pred_check_branch
        %417 = sbr.rel (%p415) target = $region40
      $region39: #{_sample_and_assign.1} parent=5 // pred_region
        %s418 = ssub.s32 %s16, 2
        // Predicated region
        $region41: #{_sample_and_assign.1} parent=39 // pred_check
          %p419 = pneg %p97
        $region42: #{_sample_and_assign.1} parent=39 // pred_check_branch
          %421 = sbr.rel (%p419) target = $region44
        $region43: #{_sample_and_assign.1} parent=39 // pred_region
          %s422 = sand.u32 %s82, 1
          %s423 = scalar_lea.sflag [#allocation3], %s422
          %s424 = sand.u32 %s82, 1
          %s425 = scalar_lea.vmem [#allocation2], %s424
          %426 = dma.done %s423, 16
        $region44: #{_sample_and_assign.1} parent=39 // pred_fallthru
          _
        // Predicated region
        $region45: #{_sample_and_assign.1} parent=39 // pred_check
          %p427 = pneg %p123
        $region46: #{_sample_and_assign.1} parent=39 // pred_check_branch
          %429 = sbr.rel (%p427) target = $region48
        $region47: #{_sample_and_assign.1} parent=39 // pred_region
          %s430 = sand.u32 %s108, 1
          %s431 = scalar_lea.sflag [#allocation5], %s430
          %s432 = sand.u32 %s108, 1
          %s433 = scalar_lea.vmem [#allocation4], %s432
          %434 = dma.done %s431, 16
        $region48: #{_sample_and_assign.1} parent=39 // pred_fallthru
          _
      $region40: #{_sample_and_assign.1} parent=5 // pred_fallthru
        _
    $region6: #{_sample_and_assign.1} parent=1 // loop_footer
      %s20 = sadd.s32 1, %s16
    $region7: #{_sample_and_assign.1} parent=1 // loop_footer_branch
      %15 = sbr.rel target = $region3
    $region8: #{_sample_and_assign.1} parent=1 // loop_exit
      _
    %435 = vsyncpa [#allocation3], 1
    %s436 = scalar_lea.sflag [#allocation3], 1
    %437 = vsyncpa %s436, 1
    %438 = vsyncpa [#allocation5], 1
    %s439 = scalar_lea.sflag [#allocation5], 1
    %440 = vsyncpa %s439, 1

</llo_original>
